<compile_context>
chip_gen: v7x
topology: tpu7x:2x2x1
jax: 0.10.0
libtpu: 0.0.40
codegen_flags: <defaults>
</compile_context>

<pallas_src>
import jax
import jax.numpy as jnp
from jax import lax
from jax.experimental import pallas as pl
from jax.experimental.pallas import tpu as pltpu

BN_EPS = 1e-5
_VMEM_LIMIT = 32 * 1024 * 1024          # explicit scoped-VMEM cap (safe on v5e/v6e/v7x)
_TILE_BUDGET = 8 * 1024 * 1024          # per-step buffer budget used to size the lane tile


def _pick_lane_tile(hw, cin, cout, budget_bytes=_TILE_BUDGET):
    """Largest lane tile (multiple of 128) that divides hw and fits the budget."""
    # double-buffered x-in + out, plus two single-buffered stats accumulators
    per_lane = 4 * (2 * cin + 2 * cout + 2 * cout)
    tl = max(128, (budget_bytes // per_lane) // 128 * 128)
    tl = min(tl, hw)
    while hw % tl != 0:
        tl -= 128
        if tl <= 0:
            # TODO(synk): non-128-divisible HW with no divisor falls back to a
            # single full-HW tile; a masked last tile would be the general fix.
            return hw
    return tl


def _stats_kernel(x_ref, w_ref, sum_ref, sq_ref, acc_sum, acc_sq):
    """Pass 1: accumulate per-channel sum and sum-of-squares of y = W @ x."""
    n = pl.program_id(0)
    t = pl.program_id(1)

    @pl.when((n == 0) & (t == 0))
    def _():
        acc_sum[...] = jnp.zeros_like(acc_sum)
        acc_sq[...] = jnp.zeros_like(acc_sq)

    x = x_ref[0]                                                     # (Cin, TL)
    y = jnp.dot(w_ref[...], x, preferred_element_type=jnp.float32)   # (Cout, TL)
    acc_sum[...] += y            # VPU adds only in the hot loop
    acc_sq[...] += y * y

    @pl.when((n == pl.num_programs(0) - 1) & (t == pl.num_programs(1) - 1))
    def _():
        # Single cross-lane (XLU) reduction at the very end of the grid.
        sum_ref[...] = jnp.sum(acc_sum[...], axis=1, keepdims=True)  # (Cout, 1)
        sq_ref[...] = jnp.sum(acc_sq[...], axis=1, keepdims=True)    # (Cout, 1)


def _apply_kernel(x_ref, w_ref, scale_ref, shift_ref, o_ref):
    """Pass 2: y = W @ x, folded BN affine (one FMA), SiLU via tanh (EUP)."""
    x = x_ref[0]                                                     # (Cin, TL)
    y = jnp.dot(w_ref[...], x, preferred_element_type=jnp.float32)   # (Cout, TL)
    z = y * scale_ref[...] + shift_ref[...]                          # folded BN
    # SiLU: z * sigmoid(z) == z * 0.5 * (1 + tanh(z/2))  -> EUP tanh
    o_ref[0] = z * (0.5 * jnp.tanh(0.5 * z) + 0.5)


def conv_module_forward(x_nchw, weight, bias, gamma, beta):
    """x_nchw: (N, Cin, H, W). weight: (Cout, Cin). Returns (N, Cout, H, W).

    Matches nn.Conv2d(1x1) -> nn.BatchNorm2d (training-mode batch stats) ->
    nn.SiLU. The conv bias is cancelled exactly by BN mean subtraction and is
    therefore not used by the kernels.
    """
    del bias  # cancelled by train-mode BatchNorm mean subtraction
    N, Cin, H, W = x_nchw.shape
    Cout = weight.shape[0]
    HW = H * W

    x3 = x_nchw.reshape(N, Cin, HW).astype(jnp.float32)   # free reshape, no transpose
    w = weight.astype(jnp.float32)                         # (Cout, Cin)

    TL = _pick_lane_tile(HW, Cin, Cout)
    grid = (N, HW // TL)

    # ---------------- Pass 1: per-channel sum / sum-of-squares ----------------
    s, ss = pl.pallas_call(
        _stats_kernel,
        out_shape=(
            jax.ShapeDtypeStruct((Cout, 1), jnp.float32),
            jax.ShapeDtypeStruct((Cout, 1), jnp.float32),
        ),
        grid_spec=pltpu.PrefetchScalarGridSpec(
            num_scalar_prefetch=0,
            grid=grid,
            in_specs=[
                pl.BlockSpec((1, Cin, TL), lambda n, t: (n, 0, t)),
                pl.BlockSpec((Cout, Cin), lambda n, t: (0, 0)),
            ],
            out_specs=(
                pl.BlockSpec((Cout, 1), lambda n, t: (0, 0)),
                pl.BlockSpec((Cout, 1), lambda n, t: (0, 0)),
            ),
            scratch_shapes=[
                pltpu.VMEM((Cout, TL), jnp.float32),
                pltpu.VMEM((Cout, TL), jnp.float32),
            ],
        ),
        compiler_params=pltpu.CompilerParams(
            dimension_semantics=("arbitrary", "arbitrary"),
            vmem_limit_bytes=_VMEM_LIMIT,
        ),
    )(x3, w)

    # Tiny per-channel math (Cout values) done in plain JAX between the passes.
    cnt = jnp.float32(N * HW)
    mean = s[:, 0] / cnt
    var = ss[:, 0] / cnt - mean * mean      # E[y^2] - mean^2 (f32 accumulation)
    scale = gamma.astype(jnp.float32) * lax.rsqrt(var + BN_EPS)
    shift = beta.astype(jnp.float32) - mean * scale
    scale2 = scale.reshape(Cout, 1)
    shift2 = shift.reshape(Cout, 1)

    # ---------------- Pass 2: normalize + SiLU (fully parallel) ---------------
    out3 = pl.pallas_call(
        _apply_kernel,
        out_shape=jax.ShapeDtypeStruct((N, Cout, HW), jnp.float32),
        grid_spec=pltpu.PrefetchScalarGridSpec(
            num_scalar_prefetch=0,
            grid=grid,
            in_specs=[
                pl.BlockSpec((1, Cin, TL), lambda n, t: (n, 0, t)),
                pl.BlockSpec((Cout, Cin), lambda n, t: (0, 0)),
                pl.BlockSpec((Cout, 1), lambda n, t: (0, 0)),
                pl.BlockSpec((Cout, 1), lambda n, t: (0, 0)),
            ],
            out_specs=pl.BlockSpec((1, Cout, TL), lambda n, t: (n, 0, t)),
        ),
        compiler_params=pltpu.CompilerParams(
            dimension_semantics=("parallel", "parallel"),
            vmem_limit_bytes=_VMEM_LIMIT,
        ),
    )(x3, w, scale2, shift2)

    return out3.reshape(N, Cout, H, W)


def _reference(x_nchw, weight, bias, gamma, beta):
    """Pure-JAX reference matching PyTorch train-mode ConvModule.forward."""
    N, Cin, H, W = x_nchw.shape
    Cout = weight.shape[0]
    xm = jnp.transpose(x_nchw, (0, 2, 3, 1)).reshape(-1, Cin)
    y = xm @ weight.T + bias[None, :]
    mean = jnp.mean(y, axis=0, keepdims=True)
    var = jnp.mean((y - mean) ** 2, axis=0, keepdims=True)
    z = (y - mean) / jnp.sqrt(var + BN_EPS) * gamma[None, :] + beta[None, :]
    z = z * jax.nn.sigmoid(z)
    return jnp.transpose(z.reshape(N, H, W, Cout), (0, 3, 1, 2))


if __name__ == "__main__":
    # Small shapes consistent with the module: batch=2, in_dim=4, out_dim=8, 16x16
    N, Cin, Cout, H, W = 2, 4, 8, 16, 16

    key = jax.random.PRNGKey(0)
    kx, kw, kb = jax.random.split(key, 3)

    x = jax.random.normal(kx, (N, Cin, H, W), dtype=jnp.float32)

    # Deterministic params mimicking PyTorch Conv2d / BatchNorm2d defaults.
    bound = 1.0 / jnp.sqrt(jnp.float32(Cin))
    conv_w = jax.random.uniform(kw, (Cout, Cin), jnp.float32, -bound, bound)
    conv_b = jax.random.uniform(kb, (Cout,), jnp.float32, -bound, bound)
    bn_gamma = jnp.ones((Cout,), jnp.float32)
    bn_beta = jnp.zeros((Cout,), jnp.float32)

    out = conv_module_forward(x, conv_w, conv_b, bn_gamma, bn_beta)
    out = jax.block_until_ready(out)

    ref = _reference(x, conv_w, conv_b, bn_gamma, bn_beta)
    assert out.shape == (N, Cout, H, W)
    assert jnp.allclose(out, ref, atol=1e-4, rtol=1e-4), float(
        jnp.max(jnp.abs(out - ref)))

    print("KERNEL_OK")
</pallas_src>

<mosaic_0001>
module attributes {stable_mosaic.version = 11 : i64} {
  func.func @_stats_kernel(%arg0: i32, %arg1: i32, %arg2: memref<1x4x256xf32, #tpu.memory_space<vmem>>, %arg3: memref<8x4xf32, #tpu.memory_space<vmem>>, %arg4: memref<8x1xf32, #tpu.memory_space<vmem>>, %arg5: memref<8x1xf32, #tpu.memory_space<vmem>>, %arg6: memref<8x256xf32, #tpu.memory_space<vmem>>, %arg7: memref<8x256xf32, #tpu.memory_space<vmem>>) attributes {dimension_semantics = [#tpu.dimension_semantics<arbitrary>, #tpu.dimension_semantics<arbitrary>], iteration_bounds = array<i64: 2, 1>, scalar_prefetch = 0 : i64, scratch_operands = 2 : i64, tpu.core_type = #tpu.core_type<tc>, window_params = [{transform_indices = @transform_0, window_bounds = array<i64: 1, 4, 256>}, {pipeline_mode = #tpu.pipeline_mode<synchronous>, transform_indices = @transform_1, window_bounds = array<i64: 8, 4>}, {pipeline_mode = #tpu.pipeline_mode<synchronous>, transform_indices = @transform_2, window_bounds = array<i64: 8, 1>}, {pipeline_mode = #tpu.pipeline_mode<synchronous>, transform_indices = @transform_3, window_bounds = array<i64: 8, 1>}]} {
    %c0_i32 = arith.constant 0 : i32
    %0 = arith.cmpi eq, %arg0, %c0_i32 : i32
    %c0_i32_0 = arith.constant 0 : i32
    %1 = arith.cmpi eq, %arg1, %c0_i32_0 : i32
    %2 = arith.andi %0, %1 : i1
    %3 = arith.extui %2 : i1 to i32
    %c0_i32_1 = arith.constant 0 : i32
    %4 = arith.cmpi ne, %3, %c0_i32_1 : i32
    scf.if %4 {
      %cst_16 = arith.constant 0.000000e+00 : f32
      %21 = vector.broadcast %cst_16 : f32 to vector<8x256xf32>
      %c0_17 = arith.constant 0 : index
      %c0_18 = arith.constant 0 : index
      %22 = vector.load %arg6[%c0_17, %c0_18] : memref<8x256xf32, #tpu.memory_space<vmem>>, vector<8x256xf32>
      tpu.vector_store %arg6[%c0_17, %c0_18], %21 {strides = array<i32>} : memref<8x256xf32, #tpu.memory_space<vmem>>, vector<8x256xf32>,
      %cst_19 = arith.constant 0.000000e+00 : f32
      %23 = vector.broadcast %cst_19 : f32 to vector<8x256xf32>
      %c0_20 = arith.constant 0 : index
      %c0_21 = arith.constant 0 : index
      %24 = vector.load %arg7[%c0_20, %c0_21] : memref<8x256xf32, #tpu.memory_space<vmem>>, vector<8x256xf32>
      tpu.vector_store %arg7[%c0_20, %c0_21], %23 {strides = array<i32>} : memref<8x256xf32, #tpu.memory_space<vmem>>, vector<8x256xf32>,
    } else {
    }
    %c0 = arith.constant 0 : index
    %c0_2 = arith.constant 0 : index
    %c0_3 = arith.constant 0 : index
    %5 = vector.load %arg2[%c0, %c0_2, %c0_3] : memref<1x4x256xf32, #tpu.memory_space<vmem>>, vector<1x4x256xf32>
    %6 = vector.shape_cast %5 : vector<1x4x256xf32> to vector<4x256xf32>
    %c0_4 = arith.constant 0 : index
    %c0_5 = arith.constant 0 : index
    %7 = vector.load %arg3[%c0_4, %c0_5] : memref<8x4xf32, #tpu.memory_space<vmem>>, vector<8x4xf32>
    %cst = arith.constant dense<0.000000e+00> : vector<8x256xf32>
    %8 = tpu.matmul %7, %6, %cst {dimension_numbers = #tpu.dot_dimension_numbers<[1], [0], [0], [1], [0, 0, 1, 1], [], []>} : vector<8x4xf32>, vector<4x256xf32>, vector<8x256xf32> -> vector<8x256xf32>
    %c0_6 = arith.constant 0 : index
    %c0_7 = arith.constant 0 : index
    %9 = vector.load %arg6[%c0_6, %c0_7] : memref<8x256xf32, #tpu.memory_space<vmem>>, vector<8x256xf32>
    %10 = arith.addf %9, %8 : vector<8x256xf32>
    %c0_8 = arith.constant 0 : index
    %c0_9 = arith.constant 0 : index
    %11 = vector.load %arg6[%c0_8, %c0_9] : memref<8x256xf32, #tpu.memory_space<vmem>>, vector<8x256xf32>
    tpu.vector_store %arg6[%c0_8, %c0_9], %10 {strides = array<i32>} : memref<8x256xf32, #tpu.memory_space<vmem>>, vector<8x256xf32>,
    %c0_10 = arith.constant 0 : index
    %c0_11 = arith.constant 0 : index
    %12 = vector.load %arg7[%c0_10, %c0_11] : memref<8x256xf32, #tpu.memory_space<vmem>>, vector<8x256xf32>
    %13 = arith.mulf %8, %8 : vector<8x256xf32>
    %14 = arith.addf %12, %13 : vector<8x256xf32>
    %c0_12 = arith.constant 0 : index
    %c0_13 = arith.constant 0 : index
    %15 = vector.load %arg7[%c0_12, %c0_13] : memref<8x256xf32, #tpu.memory_space<vmem>>, vector<8x256xf32>
    tpu.vector_store %arg7[%c0_12, %c0_13], %14 {strides = array<i32>} : memref<8x256xf32, #tpu.memory_space<vmem>>, vector<8x256xf32>,
    %c1_i32 = arith.constant 1 : i32
    %16 = arith.cmpi eq, %arg0, %c1_i32 : i32
    %c0_i32_14 = arith.constant 0 : i32
    %17 = arith.cmpi eq, %arg1, %c0_i32_14 : i32
    %18 = arith.andi %16, %17 : i1
    %19 = arith.extui %18 : i1 to i32
    %c0_i32_15 = arith.constant 0 : i32
    %20 = arith.cmpi ne, %19, %c0_i32_15 : i32
    scf.if %20 {
      %c0_16 = arith.constant 0 : index
      %c0_17 = arith.constant 0 : index
      %21 = vector.load %arg6[%c0_16, %c0_17] : memref<8x256xf32, #tpu.memory_space<vmem>>, vector<8x256xf32>
      %cst_18 = arith.constant dense<0.000000e+00> : vector<8xf32>
      %22 = vector.multi_reduction <add>, %21, %cst_18 [1] : vector<8x256xf32> to vector<8xf32>
      %23 = vector.shape_cast %22 : vector<8xf32> to vector<8x1xf32>
      %c0_19 = arith.constant 0 : index
      %c0_20 = arith.constant 0 : index
      %24 = vector.load %arg4[%c0_19, %c0_20] : memref<8x1xf32, #tpu.memory_space<vmem>>, vector<8x1xf32>
      tpu.vector_store %arg4[%c0_19, %c0_20], %23 {strides = array<i32>} : memref<8x1xf32, #tpu.memory_space<vmem>>, vector<8x1xf32>,
      %c0_21 = arith.constant 0 : index
      %c0_22 = arith.constant 0 : index
      %25 = vector.load %arg7[%c0_21, %c0_22] : memref<8x256xf32, #tpu.memory_space<vmem>>, vector<8x256xf32>
      %cst_23 = arith.constant dense<0.000000e+00> : vector<8xf32>
      %26 = vector.multi_reduction <add>, %25, %cst_23 [1] : vector<8x256xf32> to vector<8xf32>
      %27 = vector.shape_cast %26 : vector<8xf32> to vector<8x1xf32>
      %c0_24 = arith.constant 0 : index
      %c0_25 = arith.constant 0 : index
      %28 = vector.load %arg5[%c0_24, %c0_25] : memref<8x1xf32, #tpu.memory_space<vmem>>, vector<8x1xf32>
      tpu.vector_store %arg5[%c0_24, %c0_25], %27 {strides = array<i32>} : memref<8x1xf32, #tpu.memory_space<vmem>>, vector<8x1xf32>,
    } else {
    }
    return
  }
  func.func @transform_0(%arg0: i32, %arg1: i32) -> (i32, i32, i32) {
    %c0_i32 = arith.constant 0 : i32
    %c0_i32_0 = arith.constant 0 : i32
    return %arg0, %c0_i32, %arg1 : i32, i32, i32
  }
  func.func @transform_1(%arg0: i32, %arg1: i32) -> (i32, i32) {
    %c0_i32 = arith.constant 0 : i32
    %c0_i32_0 = arith.constant 0 : i32
    %c0_i32_1 = arith.constant 0 : i32
    return %c0_i32, %c0_i32_0 : i32, i32
  }
  func.func @transform_2(%arg0: i32, %arg1: i32) -> (i32, i32) {
    %c0_i32 = arith.constant 0 : i32
    %c0_i32_0 = arith.constant 0 : i32
    %c0_i32_1 = arith.constant 0 : i32
    return %c0_i32, %c0_i32_0 : i32, i32
  }
  func.func @transform_3(%arg0: i32, %arg1: i32) -> (i32, i32) {
    %c0_i32 = arith.constant 0 : i32
    %c0_i32_0 = arith.constant 0 : i32
    %c0_i32_1 = arith.constant 0 : i32
    return %c0_i32, %c0_i32_0 : i32, i32
  }
}

</mosaic_0001>

<llo_original>
// kernel: tpu_custom_call.1
$region0: #{tpu_custom_call.1}
  #allocation0 [shape = 'u32[]', space=smem, size = 0x4, offset = 0x4, fixed_abs, tag = 'smem constant byte address 0x4 - core index']
  #allocation1 [shape = 'u32[144,128]{1,0:T(1,128)}', space=vmem, size = 0x12000, scoped, tag = 'internal scratch']
  #allocation2 [shape = 'f32[8,256]{1,0:T(8,128)}', space=vmem, size = 0x2000, scoped, tag = 'scratch operand']
  #allocation3 [shape = 'f32[8,256]{1,0:T(8,128)}', space=vmem, size = 0x2000, scoped, tag = 'scratch operand']
  %s0 = inlined_call_operand.hbm [shape: f32[2,4,256], index: 0, kind: input, shape index: {}]
  %s1 = inlined_call_operand.vmem [shape: f32[8,4], index: 1, kind: input, shape index: {}]
  %s2 = inlined_call_operand.vmem [shape: f32[8,1], index: 2, kind: output, shape index: {0}]
  %s3 = inlined_call_operand.vmem [shape: f32[8,1], index: 3, kind: output, shape index: {1}]
  %4 = xla_tuple %s2, %s3
  %s5 = sld [smem:[#allocation0]]
  $region61: #{tpu_custom_call.1} parent=0
    _
  %s7 = ssub.s32 1, %s5
  %s8 = scalar_select 0, %s7, %s5
  $region1: #{tpu_custom_call.1} parent=0
    #allocation4 [shape = 'u8[8192]{0}', space=vmem, size = 0x2000, scoped, tag = 'input window, operand 0']
    #allocation5 [shape = 's32[2]{0}', space=sflag, size = 0x8, scoped, tag = 'scoped memory for tpu_custom_call.1']
    %9 = vsyncpa [#allocation5], 0
    %s10 = scalar_lea.sflag [#allocation5], 1
    %11 = vsyncpa %s10, 0
    loop: start=0, step=1, limit=4
    $region2: #{tpu_custom_call.1} parent=1 // loop_pre_header
      _
    $region3: #{tpu_custom_call.1} parent=1 // loop_header
      %s13 = sphi 0, %s17
      %p14 = scmp.ge.s32.totalorder %s13, 4
      %s20 = sphi 0, %s32
      %s21 = sphi 0, %s28
      %s22 = sphi 0, %s20
      %s23 = sphi 0, %s21
      %s24 = sphi 0, %s22
      %s25 = sphi 0, %s23
      %s37 = sphi 0, %s39
      %s40 = sphi 0, %s37
      %s41 = sphi 0, %s40
      %s57 = sphi 0, %s41
      %s61 = sphi 0, %s61
      %s63 = sphi 0, %s61
      %s64 = sphi 0, %s63
      %s78 = sphi 0, %s64
      %s82 = sphi 0, %s82
      %s84 = sphi 0, %s82
      %s85 = sphi 0, %s84
      %s99 = sphi 0, %s85
      %s103 = sphi 0, %s103
      %s105 = sphi 0, %s103
      %s106 = sphi 0, %s105
      %s120 = sphi 0, %s106
    $region4: #{tpu_custom_call.1} parent=1 // loop_header_branch
      %16 = sbr.rel (%p14) target = $region8
    $region5: #{tpu_custom_call.1} parent=1 // loop_body
      %s18 = ssub.s32 %s13, 1
      %s19 = ssub.s32 %s13, 2
      %s26 = sadd.s32 1, %s21
      %p27 = scmp.ge.s32.totalorder %s26, 1
      %s28 = scalar_select %p27, 0, %s26
      %s29 = sadd.s32 1, %s20
      %s30 = scalar_select %p27, %s29, %s20
      %p31 = scmp.ge.s32.totalorder %s30, 2
      %s32 = scalar_select %p31, 0, %s30
      %s33 = ssub.s32 %s20, %s32
      %s34 = ssub.s32 %s21, %s28
      %s35 = sor.u32 %s33, %s34
      %p36 = scmp.eq.s32.totalorder %s35, 0
      %s38 = sadd.s32 %s37, 1
      %s39 = scalar_select %p36, %s37, %s38
      %p42 = pneg %p36
      %p43 = scmp.eq.s32.totalorder %s13, 1
      %p44 = por %p42, %p43
      %p45 = scmp.ne.s32.totalorder %s37, %s40
      %p46 = scmp.eq.s32.totalorder %s13, 0
      %p47 = por %p45, %p46
      %p48 = scmp.ne.s32.totalorder %s37, %s40
      %p49 = scmp.eq.s32.totalorder %s18, 1
      %p50 = por %p48, %p49
      %p51 = scmp.ne.s32.totalorder %s40, %s41
      %p52 = scmp.eq.s32.totalorder %s18, 0
      %p53 = por %p51, %p52
      %p54 = scmp.ne.s32.totalorder %s40, %s41
      %p55 = scmp.eq.s32.totalorder %s19, 1
      %p56 = por %p54, %p55
      %p58 = scmp.ne.s32.totalorder %s41, %s57
      %p59 = scmp.eq.s32.totalorder %s19, 0
      %p60 = por %p58, %p59
      %s62 = sadd.s32 %s61, 1
      %p65 = scmp.eq.s32.totalorder %s13, 1
      %p66 = scmp.ne.s32.totalorder %s61, %s63
      %p67 = scmp.eq.s32.totalorder %s13, 0
      %p68 = por %p66, %p67
      %p69 = scmp.ne.s32.totalorder %s61, %s63
      %p70 = scmp.eq.s32.totalorder %s18, 1
      %p71 = por %p69, %p70
      %p72 = scmp.ne.s32.totalorder %s63, %s64
      %p73 = scmp.eq.s32.totalorder %s18, 0
      %p74 = por %p72, %p73
      %p75 = scmp.ne.s32.totalorder %s63, %s64
      %p76 = scmp.eq.s32.totalorder %s19, 1
      %p77 = por %p75, %p76
      %p79 = scmp.ne.s32.totalorder %s64, %s78
      %p80 = scmp.eq.s32.totalorder %s19, 0
      %p81 = por %p79, %p80
      %s83 = sadd.s32 %s82, 1
      %p86 = scmp.eq.s32.totalorder %s13, 1
      %p87 = scmp.ne.s32.totalorder %s82, %s84
      %p88 = scmp.eq.s32.totalorder %s13, 0
      %p89 = por %p87, %p88
      %p90 = scmp.ne.s32.totalorder %s82, %s84
      %p91 = scmp.eq.s32.totalorder %s18, 1
      %p92 = por %p90, %p91
      %p93 = scmp.ne.s32.totalorder %s84, %s85
      %p94 = scmp.eq.s32.totalorder %s18, 0
      %p95 = por %p93, %p94
      %p96 = scmp.ne.s32.totalorder %s84, %s85
      %p97 = scmp.eq.s32.totalorder %s19, 1
      %p98 = por %p96, %p97
      %p100 = scmp.ne.s32.totalorder %s85, %s99
      %p101 = scmp.eq.s32.totalorder %s19, 0
      %p102 = por %p100, %p101
      %s104 = sadd.s32 %s103, 1
      %p107 = scmp.eq.s32.totalorder %s13, 1
      %p108 = scmp.ne.s32.totalorder %s103, %s105
      %p109 = scmp.eq.s32.totalorder %s13, 0
      %p110 = por %p108, %p109
      %p111 = scmp.ne.s32.totalorder %s103, %s105
      %p112 = scmp.eq.s32.totalorder %s18, 1
      %p113 = por %p111, %p112
      %p114 = scmp.ne.s32.totalorder %s105, %s106
      %p115 = scmp.eq.s32.totalorder %s18, 0
      %p116 = por %p114, %p115
      %p117 = scmp.ne.s32.totalorder %s105, %s106
      %p118 = scmp.eq.s32.totalorder %s19, 1
      %p119 = por %p117, %p118
      %p121 = scmp.ne.s32.totalorder %s106, %s120
      %p122 = scmp.eq.s32.totalorder %s19, 0
      %p123 = por %p121, %p122
      %p124 = scmp.le.s32.totalorder 1, %s13
      %p125 = scmp.lt.s32.totalorder %s13, 3
      %p126 = pnand %p124, %p125
      %p127 = pneg %p126
      // Predicated region
      $region9: #{tpu_custom_call.1} parent=5 // pred_check
        _
      $region10: #{tpu_custom_call.1} parent=5 // pred_check_branch
        %129 = sbr.rel (%p126) target = $region12
      $region11: #{tpu_custom_call.1} parent=5 // pred_region
        %s130 = ssub.s32 %s13, 1
        // Predicated region
        $region13: #{tpu_custom_call.1} parent=11 // pred_check
          %p131 = pneg %p74
        $region14: #{tpu_custom_call.1} parent=11 // pred_check_branch
          %133 = sbr.rel (%p131) target = $region16
        $region15: #{tpu_custom_call.1} parent=11 // pred_region
          _
        $region16: #{tpu_custom_call.1} parent=11 // pred_fallthru
          _
      $region12: #{tpu_custom_call.1} parent=5 // pred_fallthru
        _
      %p134 = scmp.lt.s32.totalorder %s13, 2
      // Predicated region
      $region17: #{tpu_custom_call.1} parent=5 // pred_check
        %p135 = pneg %p134
      $region18: #{tpu_custom_call.1} parent=5 // pred_check_branch
        %137 = sbr.rel (%p135) target = $region20
      $region19: #{tpu_custom_call.1} parent=5 // pred_region
        // Predicated region
        $region21: #{tpu_custom_call.1} parent=19 // pred_check
          %p138 = pneg %p47
        $region22: #{tpu_custom_call.1} parent=19 // pred_check_branch
          %140 = sbr.rel (%p138) target = $region24
        $region23: #{tpu_custom_call.1} parent=19 // pred_region
          %s141 = sand.u32 %s37, 1
          %s142 = scalar_lea.sflag [#allocation5], %s141
          %s143 = sand.u32 %s37, 1
          %s144 = smul.addr %s143, 8
          %s145 = scalar_lea.vmem [#allocation4], %s144
          %s146 = smul.u32 2, %s21
          %s148 = ssub.s32 128, 128
          %149 = vsyncadd %s142, %s148
          %s150 = smul.addr %s20, 2
          %s151 = sadd.s32 %s146, %s150
          %s152 = smul.addr %s151, 64
          %s153 = scalar_lea.hbm %s0, %s152
          %s155 = sshll.u32 %s145, 4
          %s156 = int_to_ptr.vmem [resolvable:$true] %s155
          %158 = dma.hbm_to_vmem [thread:$0]  %s153, 128, %s156, %s142
        $region24: #{tpu_custom_call.1} parent=19 // pred_fallthru
          _
      $region20: #{tpu_custom_call.1} parent=5 // pred_fallthru
        _
      %p159 = scmp.le.s32.totalorder 1, %s13
      %p160 = scmp.lt.s32.totalorder %s13, 3
      %p161 = pnand %p159, %p160
      %p162 = pneg %p161
      // Predicated region
      $region25: #{tpu_custom_call.1} parent=5 // pred_check
        _
      $region26: #{tpu_custom_call.1} parent=5 // pred_check_branch
        %164 = sbr.rel (%p161) target = $region28
      $region27: #{tpu_custom_call.1} parent=5 // pred_region
        %s165 = ssub.s32 %s13, 1
        %s166 = sand.u32 %s40, 1
        %s167 = scalar_lea.sflag [#allocation5], %s166
        %s168 = sand.u32 %s40, 1
        %s169 = smul.addr %s168, 8
        %s170 = scalar_lea.vmem [#allocation4], %s169
        // Predicated region
        $region29: #{tpu_custom_call.1} parent=27 // pred_check
          %p171 = pneg %p53
        $region30: #{tpu_custom_call.1} parent=27 // pred_check_branch
          %173 = sbr.rel (%p171) target = $region32
        $region31: #{tpu_custom_call.1} parent=27 // pred_region
          %174 = dma.done %s167, 128
        $region32: #{tpu_custom_call.1} parent=27 // pred_fallthru
          _
        %s175 = sand.u32 %s40, 1
        %s176 = scalar_lea.sflag [#allocation5], %s175
        %s177 = sand.u32 %s40, 1
        %s178 = smul.addr %s177, 8
        %s179 = scalar_lea.vmem [#allocation4], %s178
        %p180 = pneg %p53
        %p181 = pneg %p50
        %p182 = pneg %p74
        %p183 = pneg %p71
        %p184 = pneg %p95
        %p185 = pneg %p92
        %p186 = pneg %p116
        %p187 = pneg %p113
        %s188 = smul.u32 2, %s23
        %p189 = scmp.eq.s32.totalorder %s22, 0
        %p190 = scmp.eq.s32.totalorder %s23, 0
        %p191 = pnand %p189, %p190
        %p192 = pneg %p191
        // Predicated region
        $region33: #{tpu_custom_call.1} parent=27 // pred_check
          _
        $region34: #{tpu_custom_call.1} parent=27 // pred_check_branch
          %194 = sbr.rel (%p191) target = $region36
        $region35: #{tpu_custom_call.1} parent=27 // pred_region
          %195 = vst [vmem:[#allocation2] sm:$0xff] 0.0
          %196 = vst [vmem:[#allocation2 + $0x8] sm:$0xff] 0.0
          %197 = vst [vmem:[#allocation3] sm:$0xff] 0.0
          %198 = vst [vmem:[#allocation3 + $0x8] sm:$0xff] 0.0
        $region36: #{tpu_custom_call.1} parent=27 // pred_fallthru
          _
        %v199 = vld [vmem:[%s170] sm:$0xff]
        %v200 = vld [vmem:[%s1] sm:$0xff]
        %v202 = vcombine.high %v199, %v199
        %vm203 = vcmask 31744
        %v205 = vsel %vm203, %v200, 0
        %vm207 = vcmask 1043456
        %v208 = vsel %vm207, %v199, 0
        %v210 = vsel %vm207, %v202, 0
        %212 = vmatprep.subr.mxu0 %v210
        %213 = vmatpush1.msra.mxu0 %v208
        %214 = vmatprep.subr.mxu0 0.0
        %215 = vmatpush1.msra.mxu0 0.0
        %216 = vmatprep.subr.mxu0 0.0
        %217 = vmatpush1.msra.mxu0 0.0
        %218 = vmatprep.subr.mxu0 0.0
        %219 = vmatpush1.msra.mxu0 0.0
        %220 = vmatprep.subr.mxu0 0.0
        %221 = vmatpush1.msra.mxu0 0.0
        %222 = vmatprep.subr.mxu0 0.0
        %223 = vmatpush1.msra.mxu0 0.0
        %224 = vmatprep.subr.mxu0 0.0
        %225 = vmatpush1.msra.mxu0 0.0
        %226 = vmatprep.subr.mxu0 0.0
        %227 = vmatpush1.msra.mxu0 0.0
        %228 = vmatprep.subr.mxu0 0.0
        %229 = vmatpush1.msra.mxu0 0.0
        %230 = vmatprep.subr.mxu0 0.0
        %231 = vmatpush1.msra.mxu0 0.0
        %232 = vmatprep.subr.mxu0 0.0
        %233 = vmatpush1.msra.mxu0 0.0
        %234 = vmatprep.subr.mxu0 0.0
        %235 = vmatpush1.msra.mxu0 0.0
        %236 = vmatprep.subr.mxu0 0.0
        %237 = vmatpush1.msra.mxu0 0.0
        %238 = vmatprep.subr.mxu0 0.0
        %239 = vmatpush1.msra.mxu0 0.0
        %240 = vmatprep.subr.mxu0 0.0
        %241 = vmatpush1.msra.mxu0 0.0
        %242 = vmatprep.subr.mxu0 0.0
        %243 = vmatpush1.msra.mxu0 0.0
        %244 = vmatprep.subr.mxu0 0.0
        %245 = vmatpush1.msra.mxu0 0.0
        %246 = vmatprep.subr.mxu0 0.0
        %247 = vmatpush1.msra.mxu0 0.0
        %248 = vmatprep.subr.mxu0 0.0
        %249 = vmatpush1.msra.mxu0 0.0
        %250 = vmatprep.subr.mxu0 0.0
        %251 = vmatpush1.msra.mxu0 0.0
        %252 = vmatprep.subr.mxu0 0.0
        %253 = vmatpush1.msra.mxu0 0.0
        %254 = vmatprep.subr.mxu0 0.0
        %255 = vmatpush1.msra.mxu0 0.0
        %256 = vmatprep.subr.mxu0 0.0
        %257 = vmatpush1.msra.mxu0 0.0
        %258 = vmatprep.subr.mxu0 0.0
        %259 = vmatpush1.msra.mxu0 0.0
        %260 = vmatprep.subr.mxu0 0.0
        %261 = vmatpush1.msra.mxu0 0.0
        %262 = vmatprep.subr.mxu0 0.0
        %263 = vmatpush1.msra.mxu0 0.0
        %264 = vmatprep.subr.mxu0 0.0
        %265 = vmatpush1.msra.mxu0 0.0
        %266 = vmatprep.subr.mxu0 0.0
        %267 = vmatpush1.msra.mxu0 0.0
        %268 = vmatprep.subr.mxu0 0.0
        %269 = vmatpush1.msra.mxu0 0.0
        %270 = vmatprep.subr.mxu0 0.0
        %271 = vmatpush1.msra.mxu0 0.0
        %272 = vmatprep.subr.mxu0 0.0
        %273 = vmatpush1.msra.mxu0 0.0
        %274 = vmatprep.subr.mxu0 0.0
        %275 = vmatpush1.msra.mxu0 0.0
        %276 = vmatprep.mubr.f32.mxu0 0.0
        %277 = vmatmul.mubr.f32.gmra.mrb[0].mxu0 %v205
        %v278 = vpop.f32.mrb[0].mxu0
        %v279 = vadd.f32 0.0, %v278
        %v280 = vpop.f32.mrb[0].mxu0
        %v281 = vadd.f32 0.0, %v280
        %282 = vdwg.mxu0
        %v283 = vld [vmem:[#allocation2] sm:$0xff]
        %v284 = vld [vmem:[#allocation2 + $0x8] sm:$0xff]
        %v285 = vadd.f32 %v283, %v279
        %v286 = vadd.f32 %v284, %v281
        %287 = vst [vmem:[#allocation2] sm:$0xff] %v285
        %288 = vst [vmem:[#allocation2 + $0x8] sm:$0xff] %v286
        %v289 = vld [vmem:[#allocation3] sm:$0xff]
        %v290 = vld [vmem:[#allocation3 + $0x8] sm:$0xff]
        %v291 = vmul.f32 %v279, %v279
        %v292 = vmul.f32 %v281, %v281
        %v293 = vadd.f32 %v289, %v291
        %v294 = vadd.f32 %v290, %v292
        %295 = vst [vmem:[#allocation3] sm:$0xff] %v293
        %296 = vst [vmem:[#allocation3 + $0x8] sm:$0xff] %v294
        %p297 = scmp.eq.s32.totalorder %s22, 1
        %p298 = pnand %p297, %p190
        %p299 = pneg %p298
        // Predicated region
        $region37: #{tpu_custom_call.1} parent=27 // pred_check
          _
        $region38: #{tpu_custom_call.1} parent=27 // pred_check_branch
          %301 = sbr.rel (%p298) target = $region40
        $region39: #{tpu_custom_call.1} parent=27 // pred_region
          %v302 = vld [vmem:[#allocation2] sm:$0xff]
          %v303 = vld [vmem:[#allocation2 + $0x8] sm:$0xff]
          %v304 = vadd.f32 %v302, %v303
          %305 = vadd.xlane.f32.xlu0 %v304
          %v306 = vpop.xlane.xlu0 %305
          %vm307 = vcmask 7168
          %308 = vst.msk [vmem:[%s2] sm:$0xff] %vm307, %v306
          %v309 = vld [vmem:[#allocation3] sm:$0xff]
          %v310 = vld [vmem:[#allocation3 + $0x8] sm:$0xff]
          %v311 = vadd.f32 %v309, %v310
          %312 = vadd.xlane.f32.xlu0 %v311
          %v313 = vpop.xlane.xlu0 %312
          %314 = vst.msk [vmem:[%s3] sm:$0xff] %vm307, %v313
        $region40: #{tpu_custom_call.1} parent=27 // pred_fallthru
          _
        // Predicated region
        $region41: #{tpu_custom_call.1} parent=27 // pred_check
          %p315 = pneg %p92
        $region42: #{tpu_custom_call.1} parent=27 // pred_check_branch
          %317 = sbr.rel (%p315) target = $region44
        $region43: #{tpu_custom_call.1} parent=27 // pred_region
          _
        $region44: #{tpu_custom_call.1} parent=27 // pred_fallthru
          _
        // Predicated region
        $region45: #{tpu_custom_call.1} parent=27 // pred_check
          %p318 = pneg %p113
        $region46: #{tpu_custom_call.1} parent=27 // pred_check_branch
          %320 = sbr.rel (%p318) target = $region48
        $region47: #{tpu_custom_call.1} parent=27 // pred_region
          _
        $region48: #{tpu_custom_call.1} parent=27 // pred_fallthru
          _
        // Predicated region
        $region49: #{tpu_custom_call.1} parent=27 // pred_check
          %p321 = pneg %p92
        $region50: #{tpu_custom_call.1} parent=27 // pred_check_branch
          %323 = sbr.rel (%p321) target = $region52
        $region51: #{tpu_custom_call.1} parent=27 // pred_region
          _
        $region52: #{tpu_custom_call.1} parent=27 // pred_fallthru
          _
        // Predicated region
        $region53: #{tpu_custom_call.1} parent=27 // pred_check
          %p324 = pneg %p113
        $region54: #{tpu_custom_call.1} parent=27 // pred_check_branch
          %326 = sbr.rel (%p324) target = $region56
        $region55: #{tpu_custom_call.1} parent=27 // pred_region
          _
        $region56: #{tpu_custom_call.1} parent=27 // pred_fallthru
          _
      $region28: #{tpu_custom_call.1} parent=5 // pred_fallthru
        _
      %p327 = scmp.le.s32.totalorder 2, %s13
      // Predicated region
      $region57: #{tpu_custom_call.1} parent=5 // pred_check
        %p328 = pneg %p327
      $region58: #{tpu_custom_call.1} parent=5 // pred_check_branch
        %330 = sbr.rel (%p328) target = $region60
      $region59: #{tpu_custom_call.1} parent=5 // pred_region
        %s331 = ssub.s32 %s13, 2
      $region60: #{tpu_custom_call.1} parent=5 // pred_fallthru
        _
    $region6: #{tpu_custom_call.1} parent=1 // loop_footer
      %s17 = sadd.s32 1, %s13
    $region7: #{tpu_custom_call.1} parent=1 // loop_footer_branch
      %12 = sbr.rel target = $region3
    $region8: #{tpu_custom_call.1} parent=1 // loop_exit
      _
    %332 = vsyncpa [#allocation5], 1
    %s333 = scalar_lea.sflag [#allocation5], 1
    %334 = vsyncpa %s333, 1

</llo_original>
